<compile_context>
chip_gen: v6e
topology: v6e:2x2x1
jax: 0.10.0
libtpu: 0.0.40
codegen_flags: <defaults>
</compile_context>

<pallas_src>
import functools
import math

import jax
import jax.numpy as jnp
from jax.experimental import pallas as pl
from jax.experimental.pallas import tpu as pltpu


_LANE = 128
_SUBLANE_ALIGN = 32            # covers f32 (8) / bf16 (16) / int8 (32) sublane tiles
_TARGET_OUT_BYTES = 4 << 20    # per (double-buffered) output block
_VMEM_LIMIT = 48 << 20         # ok on v5e/v6e (128 MiB) and v7x (64 MiB, with headroom)
_MAX_TILE_R = 8192
_MAX_PACKED_COLS = 4096


def _round_up(x: int, m: int) -> int:
    return ((x + m - 1) // m) * m


# --------------------------------------------------------------- kernels ----
def _onehot_packed_kernel(idx_ref, eye_ref, lio_ref, out_ref):
    """Lane-packed one-hot.

    idx_ref : (tile_r, k)  index values as float (exact integers)
    eye_ref : (k, cols)    slot selector: eye[j, c] = 1  iff  c // depth == j
    lio_ref : (1, cols)    local column iota: lio[0, c] = c % depth  (float32)
    out_ref : (tile_r, cols), cols = k * depth (multiple of 128)

    tgt[r, c] = idx[r, c // depth]  via MXU;  out = (tgt == c % depth).
    """
    tgt = jnp.dot(idx_ref[...], eye_ref[...], preferred_element_type=jnp.float32)
    out_ref[...] = (tgt == lio_ref[...]).astype(out_ref.dtype)


def _onehot_wide_kernel(idx_ref, out_ref, *, single_col_block: bool):
    """Plain one-hot with the depth axis tiled over grid axis 1.

    idx_ref : (tile_r, 1) int32, out_ref : (tile_r, tile_c)
    """
    tile_r, tile_c = out_ref.shape
    tgt = idx_ref[...]                                    # (tile_r, 1)
    if not single_col_block:
        # Fold the column-block offset into the narrow operand (one scalar-ish
        # sub on (tile_r, 1)) instead of adding it to the full-block iota.
        tgt = tgt - pl.program_id(1) * tile_c
    col = jax.lax.broadcasted_iota(jnp.int32, (tile_r, tile_c), 1)
    out_ref[...] = (col == tgt).astype(out_ref.dtype)


# --------------------------------------------------------------- wrapper ----
def _choose_packing(depth: int) -> int:
    """k such that k*depth is a multiple of 128 (lane-dense rows), else 1."""
    if depth % _LANE == 0:
        return 1                                          # already lane-dense
    k = _LANE // math.gcd(depth, _LANE)
    # bf16 MXU replicate is exact only for values < 2^8; with f32 operands the
    # MXU is ~4x slower, so keep k small there to stay HBM-write-bound.
    k_cap = 128 if depth <= 256 else 16
    if k > k_cap or k * depth > _MAX_PACKED_COLS:
        return 1
    while k * depth < 256 and 2 * k <= k_cap and 2 * k * depth <= _MAX_PACKED_COLS:
        k *= 2                                            # widen toward >=256 lanes
    return k


def _pick_tile_r(rows: int, tile_c: int, out_itemsize: int, idx_cols: int) -> int:
    # VMEM footprint per block row: lane-padded output + lane-padded index
    # block (a (tile_r, k) block with k < 128 pads to 128 lanes in VMEM).
    out_row_bytes = _round_up(tile_c, _LANE) * out_itemsize
    idx_row_bytes = _round_up(idx_cols, _LANE) * 4
    tile_r = _TARGET_OUT_BYTES // out_row_bytes
    budget_rows = (32 << 20) // (2 * (out_row_bytes + idx_row_bytes))  # 2x buffers
    tile_r = min(tile_r, budget_rows, _MAX_TILE_R)
    tile_r = max(_SUBLANE_ALIGN, (tile_r // _SUBLANE_ALIGN) * _SUBLANE_ALIGN)
    tile_r = min(tile_r, _round_up(rows, _SUBLANE_ALIGN))  # don't over-tile tiny inputs
    if rows > 2 * _SUBLANE_ALIGN:
        # v7x has 2 TensorCores: keep >= 2 row blocks when there is enough work.
        half = _round_up((rows + 1) // 2, _SUBLANE_ALIGN)
        tile_r = min(tile_r, half)
    return max(tile_r, _SUBLANE_ALIGN)


def one_hot(x_in, depth, dtype=jnp.float32):
    """Pallas equivalent of OneHot(depth): out[i] = eye(depth)[x_in[i]].

    Default float32 output matches torch.eye(); pass dtype=jnp.bfloat16 to
    halve HBM write traffic on this write-bound op if the consumer allows.
    """
    if depth <= 0:
        raise ValueError("depth must be positive")
    x = jnp.asarray(x_in).astype(jnp.int32).reshape(-1)
    n = int(x.shape[0])
    if n == 0:
        return jnp.zeros((0, depth), dtype)

    out_itemsize = jnp.dtype(dtype).itemsize
    k = _choose_packing(depth)

    if k > 1:
        # ---------------- lane-packed path (small / awkward depths) ----------
        cols = k * depth
        rows = pl.cdiv(n, k)
        n_pad = rows * k
        if n_pad != n:
            x = jnp.pad(x, (0, n_pad - n))                # padded tail trimmed below
        mm_dtype = jnp.bfloat16 if depth <= 256 else jnp.float32
        idx2d = x.reshape(rows, k).astype(mm_dtype)

        col_ids = jnp.arange(cols, dtype=jnp.int32)
        eye = (col_ids[None, :] // depth
               == jnp.arange(k, dtype=jnp.int32)[:, None]).astype(mm_dtype)   # (k, cols)
        lio = (col_ids % depth).astype(jnp.float32).reshape(1, cols)           # (1, cols)

        tile_r = _pick_tile_r(rows, cols, out_itemsize, k)
        grid = (pl.cdiv(rows, tile_r),)

        out2d = pl.pallas_call(
            _onehot_packed_kernel,
            out_shape=jax.ShapeDtypeStruct((rows, cols), dtype),
            grid_spec=pltpu.PrefetchScalarGridSpec(
                num_scalar_prefetch=0,
                grid=grid,
                in_specs=[
                    pl.BlockSpec((tile_r, k), lambda i: (i, 0)),
                    pl.BlockSpec((k, cols), lambda i: (0, 0)),    # fetched once
                    pl.BlockSpec((1, cols), lambda i: (0, 0)),    # fetched once
                ],
                out_specs=pl.BlockSpec((tile_r, cols), lambda i: (i, 0)),
            ),
            compiler_params=pltpu.CompilerParams(
                dimension_semantics=("parallel",),
                vmem_limit_bytes=_VMEM_LIMIT,
            ),
            cost_estimate=pl.CostEstimate(
                flops=2 * rows * cols * k + 2 * rows * cols,
                transcendentals=0,
                bytes_accessed=rows * cols * out_itemsize
                + rows * k * jnp.dtype(mm_dtype).itemsize
                + eye.size * jnp.dtype(mm_dtype).itemsize + lio.size * 4,
            ),
        )(idx2d, eye, lio)

        out = out2d.reshape(n_pad, depth)   # packed rows are row-major contiguous
        if n_pad != n:
            out = out[:n]
        return out

    # -------------------- wide path (depth % 128 == 0 or k too large) --------
    cols = depth
    tile_c = 2048 if cols > 2048 else cols
    tile_r = _pick_tile_r(n, tile_c, out_itemsize, 1)
    idx2d = x.reshape(n, 1)
    grid = (pl.cdiv(n, tile_r), pl.cdiv(cols, tile_c))
    kernel = functools.partial(_onehot_wide_kernel, single_col_block=(grid[1] == 1))

    return pl.pallas_call(
        kernel,
        out_shape=jax.ShapeDtypeStruct((n, cols), dtype),
        grid_spec=pltpu.PrefetchScalarGridSpec(
            num_scalar_prefetch=0,
            grid=grid,
            in_specs=[pl.BlockSpec((tile_r, 1), lambda i, j: (i, 0))],
            out_specs=pl.BlockSpec((tile_r, tile_c), lambda i, j: (i, j)),
        ),
        compiler_params=pltpu.CompilerParams(
            dimension_semantics=("parallel", "parallel"),
            vmem_limit_bytes=_VMEM_LIMIT,
        ),
        cost_estimate=pl.CostEstimate(
            flops=2 * n * cols,
            transcendentals=0,
            bytes_accessed=n * cols * out_itemsize + n * 4,
        ),
    )(idx2d)


if __name__ == "__main__":
    key = jax.random.PRNGKey(0)

    # 1) Small case matching the module's typical use (depth=16, packed path).
    depth = 16
    x1 = jax.random.randint(key, (8,), 0, depth, dtype=jnp.int32)
    y1 = one_hot(x1, depth)
    jax.block_until_ready(y1)
    ref1 = jnp.eye(depth, dtype=jnp.float32)[x1]
    assert y1.shape == (8, depth) and y1.dtype == jnp.float32
    assert bool(jnp.all(y1 == ref1))

    # 2) Larger N: exercises tail padding/trim and the packed multi-row path.
    x2 = jax.random.randint(jax.random.PRNGKey(1), (1000,), 0, depth, dtype=jnp.int32)
    y2 = one_hot(x2, depth)
    jax.block_until_ready(y2)
    assert y2.shape == (1000, depth)
    assert bool(jnp.all(y2 == jnp.eye(depth, dtype=jnp.float32)[x2]))

    # 3) depth that does NOT divide 128 (gcd-based packing + MXU replicate).
    d3 = 100
    x3 = jax.random.randint(jax.random.PRNGKey(2), (257,), 0, d3, dtype=jnp.int32)
    y3 = one_hot(x3, d3)
    jax.block_until_ready(y3)
    ref3 = (x3[:, None] == jnp.arange(d3)[None, :]).astype(jnp.float32)
    assert y3.shape == (257, d3)
    assert bool(jnp.all(y3 == ref3))

    # 4) Large non-divisible depth: wide path with a partial edge column block.
    d4 = 2200
    x4 = jax.random.randint(jax.random.PRNGKey(3), (10,), 0, d4, dtype=jnp.int32)
    y4 = one_hot(x4, d4)
    jax.block_until_ready(y4)
    ref4 = (x4[:, None] == jnp.arange(d4)[None, :]).astype(jnp.float32)
    assert bool(jnp.all(y4 == ref4))

    # 5) Optional bfloat16 output (halves HBM write traffic when allowed).
    y5 = one_hot(x2, depth, dtype=jnp.bfloat16)
    jax.block_until_ready(y5)
    assert y5.dtype == jnp.bfloat16
    assert bool(jnp.all(y5.astype(jnp.float32) == jnp.eye(depth, dtype=jnp.float32)[x2]))

    print("KERNEL_OK")
</pallas_src>

<mosaic_0001>
module attributes {stable_mosaic.version = 11 : i64} {
  func.func @_onehot_packed_kernel(%arg0: i32, %arg1: memref<32x16xbf16, #tpu.memory_space<vmem>>, %arg2: memref<16x256xbf16, #tpu.memory_space<vmem>>, %arg3: memref<1x256xf32, #tpu.memory_space<vmem>>, %arg4: memref<32x256xf32, #tpu.memory_space<vmem>>) attributes {dimension_semantics = [#tpu.dimension_semantics<parallel>], iteration_bounds = array<i64: 1>, scalar_prefetch = 0 : i64, scratch_operands = 0 : i64, tpu.core_type = #tpu.core_type<tc>, window_params = [{transform_indices = @transform_0, window_bounds = array<i64: 32, 16>}, {pipeline_mode = #tpu.pipeline_mode<synchronous>, transform_indices = @transform_1, window_bounds = array<i64: 16, 256>}, {pipeline_mode = #tpu.pipeline_mode<synchronous>, transform_indices = @transform_2, window_bounds = array<i64: 1, 256>}, {transform_indices = @transform_3, window_bounds = array<i64: 32, 256>}]} {
    %c0 = arith.constant 0 : index
    %c0_0 = arith.constant 0 : index
    %0 = vector.load %arg1[%c0, %c0_0] : memref<32x16xbf16, #tpu.memory_space<vmem>>, vector<32x16xbf16>
    %c0_1 = arith.constant 0 : index
    %c0_2 = arith.constant 0 : index
    %1 = vector.load %arg2[%c0_1, %c0_2] : memref<16x256xbf16, #tpu.memory_space<vmem>>, vector<16x256xbf16>
    %cst = arith.constant dense<0.000000e+00> : vector<32x256xf32>
    %2 = tpu.matmul %0, %1, %cst {dimension_numbers = #tpu.dot_dimension_numbers<[1], [0], [0], [1], [0, 0, 1, 1], [], []>} : vector<32x16xbf16>, vector<16x256xbf16>, vector<32x256xf32> -> vector<32x256xf32>
    %c0_3 = arith.constant 0 : index
    %c0_4 = arith.constant 0 : index
    %3 = vector.load %arg3[%c0_3, %c0_4] : memref<1x256xf32, #tpu.memory_space<vmem>>, vector<1x256xf32>
    %4 = vector.broadcast %3 : vector<1x256xf32> to vector<32x256xf32>
    %5 = arith.cmpf oeq, %2, %4 : vector<32x256xf32>
    %6 = arith.extui %5 : vector<32x256xi1> to vector<32x256xi32>
    %7 = arith.sitofp %6 : vector<32x256xi32> to vector<32x256xf32>
    %c0_5 = arith.constant 0 : index
    %c0_6 = arith.constant 0 : index
    %8 = vector.load %arg4[%c0_5, %c0_6] : memref<32x256xf32, #tpu.memory_space<vmem>>, vector<32x256xf32>
    tpu.vector_store %arg4[%c0_5, %c0_6], %7 {strides = array<i32>} : memref<32x256xf32, #tpu.memory_space<vmem>>, vector<32x256xf32>,
    return
  }
  func.func @transform_0(%arg0: i32) -> (i32, i32) {
    %c0_i32 = arith.constant 0 : i32
    %c0_i32_0 = arith.constant 0 : i32
    return %arg0, %c0_i32 : i32, i32
  }
  func.func @transform_1(%arg0: i32) -> (i32, i32) {
    %c0_i32 = arith.constant 0 : i32
    %c0_i32_0 = arith.constant 0 : i32
    %c0_i32_1 = arith.constant 0 : i32
    return %c0_i32, %c0_i32_0 : i32, i32
  }
  func.func @transform_2(%arg0: i32) -> (i32, i32) {
    %c0_i32 = arith.constant 0 : i32
    %c0_i32_0 = arith.constant 0 : i32
    %c0_i32_1 = arith.constant 0 : i32
    return %c0_i32, %c0_i32_0 : i32, i32
  }
  func.func @transform_3(%arg0: i32) -> (i32, i32) {
    %c0_i32 = arith.constant 0 : i32
    %c0_i32_0 = arith.constant 0 : i32
    return %arg0, %c0_i32 : i32, i32
  }
}

</mosaic_0001>

<llo_original>
// kernel: tpu_custom_call.1
$region0: #{tpu_custom_call.1}
  #allocation0 [shape = 'u32[]', space=smem, size = 0x4, offset = 0x4, fixed_abs, tag = 'smem constant byte address 0x4 - core index']
  #allocation1 [shape = 'u32[144,128]{1,0:T(1,128)}', space=vmem, size = 0x12000, scoped, tag = 'internal scratch']
  %s0 = inlined_call_operand.hbm [shape: bf16[1,16], index: 0, kind: input, shape index: {}]
  %s1 = inlined_call_operand.hbm [shape: bf16[16,256], index: 1, kind: input, shape index: {}]
  %s2 = inlined_call_operand.vmem [shape: f32[1,256], index: 2, kind: input, shape index: {}]
  %s3 = inlined_call_operand.hbm [shape: f32[1,256], index: 3, kind: output, shape index: {}]
  %s4 = sld [smem:[#allocation0]]
  $region30: #{tpu_custom_call.1} parent=0
    _
  %s6 = ssub.s32 1, %s4
  %s7 = scalar_select 0, %s6, %s4
  $region1: #{tpu_custom_call.1} parent=0
    #allocation2 [shape = 'u8[8192]{0}', space=vmem, size = 0x2000, scoped, tag = 'input window, operand 0, single buffered']
    #allocation3 [shape = 's32[1]{0}', space=sflag, size = 0x4, scoped, tag = 'scoped memory for tpu_custom_call.1']
    #allocation4 [shape = 's32[1]{0}', space=sflag, size = 0x4, scoped, tag = 'scoped memory for tpu_custom_call.1']
    #allocation5 [shape = 'u8[8192]{0}', space=vmem, size = 0x2000, scoped, tag = 'input window, operand 1, single buffered']
    #allocation6 [shape = 's32[1]{0}', space=sflag, size = 0x4, scoped, tag = 'scoped memory for tpu_custom_call.1']
    #allocation7 [shape = 'u8[32768]{0}', space=vmem, size = 0x8000, scoped, tag = 'output window, operand 0, single buffered']
    %8 = vsyncpa [#allocation3], 0
    %9 = vsyncpa [#allocation6], 0
    %10 = vsyncpa [#allocation4], 0
    // Predicated region
    $region2: #{tpu_custom_call.1} parent=1 // pred_check
      _
    $region3: #{tpu_custom_call.1} parent=1 // pred_check_branch
      %12 = sbr.rel (0) target = $region5
    $region4: #{tpu_custom_call.1} parent=1 // pred_region
      %s14 = ssub.s32 256, 16
      %15 = vsyncadd [#allocation3], %s14
      %s16 = sshll.u32 [#allocation2], 4
      %s17 = int_to_ptr.vmem [resolvable:$true] %s16
      %22 = dma.hbm_to_vmem [thread:$0]  %s0, 16, %s17, [#allocation3], 16, 16, 1
    $region5: #{tpu_custom_call.1} parent=1 // pred_fallthru
      _
    // Predicated region
    $region6: #{tpu_custom_call.1} parent=1 // pred_check
      _
    $region7: #{tpu_custom_call.1} parent=1 // pred_check_branch
      %24 = sbr.rel (0) target = $region9
    $region8: #{tpu_custom_call.1} parent=1 // pred_region
      %s26 = ssub.s32 256, 256
      %27 = vsyncadd [#allocation6], %s26
      %s28 = sshll.u32 [#allocation5], 4
      %s29 = int_to_ptr.vmem [resolvable:$true] %s28
      %34 = dma.hbm_to_vmem [thread:$0]  %s1, 256, %s29, [#allocation6], 128, 128, 8
    $region9: #{tpu_custom_call.1} parent=1 // pred_fallthru
      _
    // Predicated region
    $region10: #{tpu_custom_call.1} parent=1 // pred_check
      _
    $region11: #{tpu_custom_call.1} parent=1 // pred_check_branch
      %36 = sbr.rel (0) target = $region13
    $region12: #{tpu_custom_call.1} parent=1 // pred_region
      _
    $region13: #{tpu_custom_call.1} parent=1 // pred_fallthru
      _
    // Predicated region
    $region14: #{tpu_custom_call.1} parent=1 // pred_check
      _
    $region15: #{tpu_custom_call.1} parent=1 // pred_check_branch
      %38 = sbr.rel (0) target = $region17
    $region16: #{tpu_custom_call.1} parent=1 // pred_region
      %39 = dma.done [#allocation3], 256
    $region17: #{tpu_custom_call.1} parent=1 // pred_fallthru
      _
    // Predicated region
    $region18: #{tpu_custom_call.1} parent=1 // pred_check
      _
    $region19: #{tpu_custom_call.1} parent=1 // pred_check_branch
      %41 = sbr.rel (0) target = $region21
    $region20: #{tpu_custom_call.1} parent=1 // pred_region
      %42 = dma.done [#allocation6], 256
    $region21: #{tpu_custom_call.1} parent=1 // pred_fallthru
      _
    %v44 = vld [vmem:[#allocation2] sm:$0x1]
    %v45 = vld [vmem:[#allocation2 + $0x1] sm:$0x1]
    %v46 = vld [vmem:[#allocation2 + $0x2] sm:$0x1]
    %v47 = vld [vmem:[#allocation2 + $0x3] sm:$0x1]
    %v48 = vld [vmem:[#allocation2 + $0x4] sm:$0x1]
    %v49 = vld [vmem:[#allocation2 + $0x5] sm:$0x1]
    %v50 = vld [vmem:[#allocation2 + $0x6] sm:$0x1]
    %v51 = vld [vmem:[#allocation2 + $0x7] sm:$0x1]
    %v52 = vld [vmem:[#allocation2 + $0x8] sm:$0x1]
    %v53 = vld [vmem:[#allocation2 + $0x9] sm:$0x1]
    %v54 = vld [vmem:[#allocation2 + $0xa] sm:$0x1]
    %v55 = vld [vmem:[#allocation2 + $0xb] sm:$0x1]
    %v56 = vld [vmem:[#allocation2 + $0xc] sm:$0x1]
    %v57 = vld [vmem:[#allocation2 + $0xd] sm:$0x1]
    %v58 = vld [vmem:[#allocation2 + $0xe] sm:$0x1]
    %v59 = vld [vmem:[#allocation2 + $0xf] sm:$0x1]
    %v60 = vld [vmem:[#allocation5] sm:$0xff]
    %v61 = vld [vmem:[#allocation5 + $0x8] sm:$0xff]
    %v78 = vcombine.low %v44, %v45
    %v79 = vcombine.low %v46, %v47
    %v80 = vcombine.low %v48, %v49
    %v81 = vcombine.low %v50, %v51
    %v83 = vunpack.c.l.s4 1966171168
    %v84 = vunpack.c.0.s8 %v83
    %v85 = vlaneseq
    %v86 = vshrl.u32 %v85, 7
    %v87 = vsub.s32 %v84, %v86
    %v88 = vrot.slane %v78, %v87
    %v90 = vunpack.c.l.s4 1966171168
    %v91 = vunpack.c.0.s8 %v90
    %v92 = vlaneseq
    %v93 = vshrl.u32 %v92, 7
    %v94 = vsub.s32 %v91, %v93
    %v95 = vrot.slane %v79, %v94
    %v97 = vunpack.c.l.s4 1966171168
    %v98 = vunpack.c.0.s8 %v97
    %v99 = vlaneseq
    %v100 = vshrl.u32 %v99, 7
    %v101 = vsub.s32 %v98, %v100
    %v102 = vrot.slane %v80, %v101
    %v104 = vunpack.c.l.s4 1966171168
    %v105 = vunpack.c.0.s8 %v104
    %v106 = vlaneseq
    %v107 = vshrl.u32 %v106, 7
    %v108 = vsub.s32 %v105, %v107
    %v109 = vrot.slane %v81, %v108
    %v110 = vcombine.low %v88, %v95
    %v111 = vcombine.low %v102, %v109
    %v113 = vunpack.c.l.s4 1966171168
    %v114 = vunpack.c.0.s8 %v113
    %v115 = vlaneseq
    %v116 = vshrl.u32 %v115, 7
    %v117 = vsub.s32 %v114, %v116
    %v118 = vrot.slane %v110, %v117
    %v120 = vunpack.c.l.s4 1966171168
    %v121 = vunpack.c.0.s8 %v120
    %v122 = vlaneseq
    %v123 = vshrl.u32 %v122, 7
    %v124 = vsub.s32 %v121, %v123
    %v125 = vrot.slane %v111, %v124
    %v126 = vcombine.low %v118, %v125
    %v127 = vcombine.low %v52, %v53
    %v128 = vcombine.low %v54, %v55
    %v129 = vcombine.low %v56, %v57
    %v130 = vcombine.low %v58, %v59
    %v132 = vunpack.c.l.s4 1966171168
    %v133 = vunpack.c.0.s8 %v132
    %v134 = vlaneseq
    %v135 = vshrl.u32 %v134, 7
    %v136 = vsub.s32 %v133, %v135
    %v137 = vrot.slane %v127, %v136
    %v139 = vunpack.c.l.s4 1966171168
    %v140 = vunpack.c.0.s8 %v139
    %v141 = vlaneseq
    %v142 = vshrl.u32 %v141, 7
    %v143 = vsub.s32 %v140, %v142
    %v144 = vrot.slane %v128, %v143
    %v146 = vunpack.c.l.s4 1966171168
    %v147 = vunpack.c.0.s8 %v146
    %v148 = vlaneseq
    %v149 = vshrl.u32 %v148, 7
    %v150 = vsub.s32 %v147, %v149
    %v151 = vrot.slane %v129, %v150
    %v153 = vunpack.c.l.s4 1966171168
    %v154 = vunpack.c.0.s8 %v153
    %v155 = vlaneseq
    %v156 = vshrl.u32 %v155, 7
    %v157 = vsub.s32 %v154, %v156
    %v158 = vrot.slane %v130, %v157
    %v159 = vcombine.low %v137, %v144
    %v160 = vcombine.low %v151, %v158
    %v162 = vunpack.c.l.s4 1966171168
    %v163 = vunpack.c.0.s8 %v162
    %v164 = vlaneseq
    %v165 = vshrl.u32 %v164, 7
    %v166 = vsub.s32 %v163, %v165
    %v167 = vrot.slane %v159, %v166
    %v169 = vunpack.c.l.s4 1966171168
    %v170 = vunpack.c.0.s8 %v169
    %v171 = vlaneseq
    %v172 = vshrl.u32 %v171, 7
    %v173 = vsub.s32 %v170, %v172
    %v174 = vrot.slane %v160, %v173
    %v175 = vcombine.low %v167, %v174
    %v178 = vunpack.c.l.b16 %v60
    %v179 = vunpack.c.h.b16 %v60
    %v180 = vunpack.c.l.b16 %v61
    %v181 = vunpack.c.h.b16 %v61
    %v182 = vpack.c.b16 %v180, %v178
    %v183 = vpack.c.b16 %v181, %v179
    %vm186 = vcmask 130048
    %v188 = vsel %vm186, %v126, 0
    %v191 = vsel %vm186, %v175, 0
    %193 = vmatprep.subr.bf16.mxu0 0
    %194 = vmatpush1.bf16.msra.mxu0 0
    %195 = vmatprep.subr.bf16.mxu0 0
    %196 = vmatpush1.bf16.msra.mxu0 0
    %197 = vmatprep.subr.bf16.mxu0 0
    %198 = vmatpush1.bf16.msra.mxu0 0
    %199 = vmatprep.subr.bf16.mxu0 0
    %200 = vmatpush1.bf16.msra.mxu0 0
    %201 = vmatprep.subr.bf16.mxu0 0
    %202 = vmatpush1.bf16.msra.mxu0 0
    %203 = vmatprep.subr.bf16.mxu0 0
    %204 = vmatpush1.bf16.msra.mxu0 0
    %205 = vmatprep.subr.bf16.mxu0 0
    %206 = vmatpush1.bf16.msra.mxu0 0
    %207 = vmatprep.subr.bf16.mxu0 %v183
    %208 = vmatpush1.bf16.msra.mxu0 %v182
    %209 = vmatprep.subr.bf16.mxu0 0
    %210 = vmatpush2.bf16.msra.mxu0 0
    %211 = vmatprep.subr.bf16.mxu0 0
    %212 = vmatpush2.bf16.msra.mxu0 0
    %213 = vmatprep.subr.bf16.mxu0 0
    %214 = vmatpush2.bf16.msra.mxu0 0
    %215 = vmatprep.subr.bf16.mxu0 0
    %216 = vmatpush2.bf16.msra.mxu0 0
    %217 = vmatprep.subr.bf16.mxu0 0
    %218 = vmatpush2.bf16.msra.mxu0 0
    %219 = vmatprep.subr.bf16.mxu0 0
    %220 = vmatpush2.bf16.msra.mxu0 0
    %221 = vmatprep.subr.bf16.mxu0 0
    %222 = vmatpush2.bf16.msra.mxu0 0
    %223 = vmatprep.subr.bf16.mxu0 0
    %224 = vmatpush2.bf16.msra.mxu0 0
    %225 = vmatprep.mubr.bf16.mxu0 0
    %226 = vmatmul.mubr.bf16.gmra.mxu0 %v188
    %v227 = vpop.f32.mrf.mxu0
    %v228 = vadd.f32 0.0, %v227
    %v229 = vpop.f32.mrf.mxu0
    %v230 = vadd.f32 0.0, %v229
    %v231 = vpop.f32.mrf.mxu0
    %v232 = vadd.f32 0.0, %v231
    %v233 = vpop.f32.mrf.mxu0
    %v234 = vadd.f32 0.0, %v233
    %235 = vmatprep.mubr.bf16.mxu0 0
    %236 = vmatmul.mubr.bf16.gmra.mxu0 %v191
    %v237 = vpop.f32.mrf.mxu0
    %v238 = vadd.f32 0.0, %v237
    %v239 = vpop.f32.mrf.mxu0
    %v240 = vadd.f32 0.0, %v239
    %v241 = vpop.f32.mrf.mxu0
    %v242 = vadd.f32 0.0, %v241
    %v243 = vpop.f32.mrf.mxu0
    %v244 = vadd.f32 0.0, %v243
    %245 = vdwg.mxu0
    %v246 = vld [vmem:[%s2] sm:$0x3]
    %v248 = vlaneseq
    %v249 = vshrl.u32 %v248, 7
    %v250 = vsub.s32 0, %v249
    %v251 = vrot.slane %v246, %v250
    %v252 = vlaneseq
    %v253 = vshrl.u32 %v252, 7
    %v254 = vsub.s32 1, %v253
    %v255 = vrot.slane %v246, %v254
    %vm258 = vcmp.eq.f32.partialorder %v228, %v251
    %vm259 = vcmp.eq.f32.partialorder %v230, %v255
    %vm260 = vcmp.eq.f32.partialorder %v232, %v251
    %vm261 = vcmp.eq.f32.partialorder %v234, %v255
    %vm262 = vcmp.eq.f32.partialorder %v238, %v251
    %vm263 = vcmp.eq.f32.partialorder %v240, %v255
    %vm264 = vcmp.eq.f32.partialorder %v242, %v251
    %vm265 = vcmp.eq.f32.partialorder %v244, %v255
    %v266 = vsel %vm258, 1, 0
    %v267 = vsel %vm259, 1, 0
    %v268 = vsel %vm260, 1, 0
    %v269 = vsel %vm261, 1, 0
    %v270 = vsel %vm262, 1, 0
    %v271 = vsel %vm263, 1, 0
    %v272 = vsel %vm264, 1, 0
    %v273 = vsel %vm265, 1, 0
    %v274 = vcvt.s32.f32 %v266
    %v275 = vcvt.s32.f32 %v267
    %v276 = vcvt.s32.f32 %v268
    %v277 = vcvt.s32.f32 %v269
    %v278 = vcvt.s32.f32 %v270
    %v279 = vcvt.s32.f32 %v271
    %v280 = vcvt.s32.f32 %v272
    %v281 = vcvt.s32.f32 %v273
    %v290 = vcombine.low %v274, %v275
    %v291 = vcombine.high %v274, %v275
    %v293 = vunpack.c.l.s4 1966171168
    %v294 = vunpack.c.0.s8 %v293
    %v295 = vlaneseq
    %v296 = vshrl.u32 %v295, 7
    %v297 = vsub.s32 %v294, %v296
    %v298 = vrot.slane %v290, %v297
    %v300 = vunpack.c.l.s4 1966171168
    %v301 = vunpack.c.0.s8 %v300
    %v302 = vlaneseq
    %v303 = vshrl.u32 %v302, 7
    %v304 = vsub.s32 %v301, %v303
    %v305 = vrot.slane %v291, %v304
    %v306 = vcombine.high %v298, %v298
    %v307 = vcombine.high %v305, %v305
    %v309 = vunpack.c.l.s4 1966171168
    %v310 = vunpack.c.0.s8 %v309
    %v311 = vlaneseq
    %v312 = vshrl.u32 %v311, 7
    %v313 = vsub.s32 %v310, %v312
    %v314 = vrot.slane %v298, %v313
    %v316 = vunpack.c.l.s4 1966171168
    %v317 = vunpack.c.0.s8 %v316
    %v318 = vlaneseq
    %v319 = vshrl.u32 %v318, 7
    %v320 = vsub.s32 %v317, %v319
    %v321 = vrot.slane %v305, %v320
    %v323 = vunpack.c.l.s4 1966171168
    %v324 = vunpack.c.0.s8 %v323
    %v325 = vlaneseq
    %v326 = vshrl.u32 %v325, 7
    %v327 = vsub.s32 %v324, %v326
    %v328 = vrot.slane %v306, %v327
    %v330 = vunpack.c.l.s4 1966171168
    %v331 = vunpack.c.0.s8 %v330
    %v332 = vlaneseq
    %v333 = vshrl.u32 %v332, 7
    %v334 = vsub.s32 %v331, %v333
    %v335 = vrot.slane %v307, %v334
    %v336 = vcombine.high %v314, %v314
    %v337 = vcombine.high %v321, %v321
    %v338 = vcombine.high %v328, %v328
    %v339 = vcombine.high %v335, %v335
    %v340 = vcombine.low %v276, %v277
    %v341 = vcombine.high %v276, %v277
    %v343 = vunpack.c.l.s4 1966171168
    %v344 = vunpack.c.0.s8 %v343
    %v345 = vlaneseq
    %v346 = vshrl.u32 %v345, 7
    %v347 = vsub.s32 %v344, %v346
    %v348 = vrot.slane %v340, %v347
    %v350 = vunpack.c.l.s4 1966171168
    %v351 = vunpack.c.0.s8 %v350
    %v352 = vlaneseq
    %v353 = vshrl.u32 %v352, 7
    %v354 = vsub.s32 %v351, %v353
    %v355 = vrot.slane %v341, %v354
    %v356 = vcombine.high %v348, %v348
    %v357 = vcombine.high %v355, %v355
    %v359 = vunpack.c.l.s4 1966171168
    %v360 = vunpack.c.0.s8 %v359
    %v361 = vlaneseq
    %v362 = vshrl.u32 %v361, 7
    %v363 = vsub.s32 %v360, %v362
    %v364 = vrot.slane %v348, %v363
    %v366 = vunpack.c.l.s4 1966171168
    %v367 = vunpack.c.0.s8 %v366
    %v368 = vlaneseq
    %v369 = vshrl.u32 %v368, 7
    %v370 = vsub.s32 %v367, %v369
    %v371 = vrot.slane %v355, %v370
    %v373 = vunpack.c.l.s4 1966171168
    %v374 = vunpack.c.0.s8 %v373
    %v375 = vlaneseq
    %v376 = vshrl.u32 %v375, 7
    %v377 = vsub.s32 %v374, %v376
    %v378 = vrot.slane %v356, %v377
    %v380 = vunpack.c.l.s4 1966171168
    %v381 = vunpack.c.0.s8 %v380
    %v382 = vlaneseq
    %v383 = vshrl.u32 %v382, 7
    %v384 = vsub.s32 %v381, %v383
    %v385 = vrot.slane %v357, %v384
    %v386 = vcombine.high %v364, %v364
    %v387 = vcombine.high %v371, %v371
    %v388 = vcombine.high %v378, %v378
    %v389 = vcombine.high %v385, %v385
    %v390 = vcombine.low %v278, %v279
    %v391 = vcombine.high %v278, %v279
    %v393 = vunpack.c.l.s4 1966171168
    %v394 = vunpack.c.0.s8 %v393
    %v395 = vlaneseq
    %v396 = vshrl.u32 %v395, 7
    %v397 = vsub.s32 %v394, %v396
    %v398 = vrot.slane %v390, %v397
    %v400 = vunpack.c.l.s4 1966171168
    %v401 = vunpack.c.0.s8 %v400
    %v402 = vlaneseq
    %v403 = vshrl.u32 %v402, 7
    %v404 = vsub.s32 %v401, %v403
    %v405 = vrot.slane %v391, %v404
    %v406 = vcombine.high %v398, %v398
    %v407 = vcombine.high %v405, %v405
    %v409 = vunpack.c.l.s4 1966171168
    %v410 = vunpack.c.0.s8 %v409
    %v411 = vlaneseq
    %v412 = vshrl.u32 %v411, 7
    %v413 = vsub.s32 %v410, %v412
    %v414 = vrot.slane %v398, %v413
    %v416 = vunpack.c.l.s4 1966171168
    %v417 = vunpack.c.0.s8 %v416
    %v418 = vlaneseq
    %v419 = vshrl.u32 %v418, 7
    %v420 = vsub.s32 %v417, %v419
    %v421 = vrot.slane %v405, %v420
    %v423 = vunpack.c.l.s4 1966171168
    %v424 = vunpack.c.0.s8 %v423
    %v425 = vlaneseq
    %v426 = vshrl.u32 %v425, 7
    %v427 = vsub.s32 %v424, %v426
    %v428 = vrot.slane %v406, %v427
    %v430 = vunpack.c.l.s4 1966171168
    %v431 = vunpack.c.0.s8 %v430
    %v432 = vlaneseq
    %v433 = vshrl.u32 %v432, 7
    %v434 = vsub.s32 %v431, %v433
    %v435 = vrot.slane %v407, %v434
    %v436 = vcombine.high %v414, %v414
    %v437 = vcombine.high %v421, %v421
    %v438 = vcombine.high %v428, %v428
    %v439 = vcombine.high %v435, %v435
    %v440 = vcombine.low %v280, %v281
    %v441 = vcombine.high %v280, %v281
    %v443 = vunpack.c.l.s4 1966171168
    %v444 = vunpack.c.0.s8 %v443
    %v445 = vlaneseq
    %v446 = vshrl.u32 %v445, 7
    %v447 = vsub.s32 %v444, %v446
    %v448 = vrot.slane %v440, %v447
    %v450 = vunpack.c.l.s4 1966171168
    %v451 = vunpack.c.0.s8 %v450
    %v452 = vlaneseq
    %v453 = vshrl.u32 %v452, 7
    %v454 = vsub.s32 %v451, %v453
    %v455 = vrot.slane %v441, %v454
    %v456 = vcombine.high %v448, %v448
    %v457 = vcombine.high %v455, %v455
    %v459 = vunpack.c.l.s4 1966171168
    %v460 = vunpack.c.0.s8 %v459
    %v461 = vlaneseq
    %v462 = vshrl.u32 %v461, 7
    %v463 = vsub.s32 %v460, %v462
    %v464 = vrot.slane %v448, %v463
    %v466 = vunpack.c.l.s4 1966171168
    %v467 = vunpack.c.0.s8 %v466
    %v468 = vlaneseq
    %v469 = vshrl.u32 %v468, 7
    %v470 = vsub.s32 %v467, %v469
    %v471 = vrot.slane %v455, %v470
    %v473 = vunpack.c.l.s4 1966171168
    %v474 = vunpack.c.0.s8 %v473
    %v475 = vlaneseq
    %v476 = vshrl.u32 %v475, 7
    %v477 = vsub.s32 %v474, %v476
    %v478 = vrot.slane %v456, %v477
    %v480 = vunpack.c.l.s4 1966171168
    %v481 = vunpack.c.0.s8 %v480
    %v482 = vlaneseq
    %v483 = vshrl.u32 %v482, 7
    %v484 = vsub.s32 %v481, %v483
    %v485 = vrot.slane %v457, %v484
    %v486 = vcombine.high %v464, %v464
    %v487 = vcombine.high %v471, %v471
    %v488 = vcombine.high %v478, %v478
    %v489 = vcombine.high %v485, %v485
    %v522 = vlaneseq
    %vm523 = vcmp.ge.s32.totalorder %v522, 0
    %vm524 = vcmp.lt.s32.totalorder %v522, 256
    %vm525 = vmand %vm523, %vm524
    %526 = vst.msk [vmem:[#allocation7] sm:$0x3] %vm525, %v314
    %527 = vst.msk [vmem:[#allocation7 + $0x2] sm:$0x3] %vm525, %v328
    %528 = vst.msk [vmem:[#allocation7 + $0x4] sm:$0x3] %vm525, %v336
    %529 = vst.msk [vmem:[#allocation7 + $0x6] sm:$0x3] %vm525, %v338
    %530 = vst.msk [vmem:[#allocation7 + $0x8] sm:$0x3] %vm525, %v321
    %531 = vst.msk [vmem:[#allocation7 + $0xa] sm:$0x3] %vm525, %v335
    %532 = vst.msk [vmem:[#allocation7 + $0xc] sm:$0x3] %vm525, %v337
    %533 = vst.msk [vmem:[#allocation7 + $0xe] sm:$0x3] %vm525, %v339
    %534 = vst.msk [vmem:[#allocation7 + $0x10] sm:$0x3] %vm525, %v364
    %535 = vst.msk [vmem:[#allocation7 + $0x12] sm:$0x3] %vm525, %v378
    %536 = vst.msk [vmem:[#allocation7 + $0x14] sm:$0x3] %vm525, %v386
    %537 = vst.msk [vmem:[#allocation7 + $0x16] sm:$0x3] %vm525, %v388
    %538 = vst.msk [vmem:[#allocation7 + $0x18] sm:$0x3] %vm525, %v371
    %539 = vst.msk [vmem:[#allocation7 + $0x1a] sm:$0x3] %vm525, %v385
    %540 = vst.msk [vmem:[#allocation7 + $0x1c] sm:$0x3] %vm525, %v387
    %541 = vst.msk [vmem:[#allocation7 + $0x1e] sm:$0x3] %vm525, %v389
    %542 = vst.msk [vmem:[#allocation7 + $0x20] sm:$0x3] %vm525, %v414
    %543 = vst.msk [vmem:[#allocation7 + $0x22] sm:$0x3] %vm525, %v428
    %544 = vst.msk [vmem:[#allocation7 + $0x24] sm:$0x3] %vm525, %v436
    %545 = vst.msk [vmem:[#allocation7 + $0x26] sm:$0x3] %vm525, %v438
    %546 = vst.msk [vmem:[#allocation7 + $0x28] sm:$0x3] %vm525, %v421
    %547 = vst.msk [vmem:[#allocation7 + $0x2a] sm:$0x3] %vm525, %v435
    %548 = vst.msk [vmem:[#allocation7 + $0x2c] sm:$0x3] %vm525, %v437
    %549 = vst.msk [vmem:[#allocation7 + $0x2e] sm:$0x3] %vm525, %v439
    %550 = vst.msk [vmem:[#allocation7 + $0x30] sm:$0x3] %vm525, %v464
    %551 = vst.msk [vmem:[#allocation7 + $0x32] sm:$0x3] %vm525, %v478
    %552 = vst.msk [vmem:[#allocation7 + $0x34] sm:$0x3] %vm525, %v486
    %553 = vst.msk [vmem:[#allocation7 + $0x36] sm:$0x3] %vm525, %v488
    %554 = vst.msk [vmem:[#allocation7 + $0x38] sm:$0x3] %vm525, %v471
    %555 = vst.msk [vmem:[#allocation7 + $0x3a] sm:$0x3] %vm525, %v485
    %556 = vst.msk [vmem:[#allocation7 + $0x3c] sm:$0x3] %vm525, %v487
    %557 = vst.msk [vmem:[#allocation7 + $0x3e] sm:$0x3] %vm525, %v489
    // Predicated region
    $region22: #{tpu_custom_call.1} parent=1 // pred_check
      _
    $region23: #{tpu_custom_call.1} parent=1 // pred_check_branch
      %559 = sbr.rel (0) target = $region25
    $region24: #{tpu_custom_call.1} parent=1 // pred_region
      %s561 = ssub.s32 1024, 32
      %562 = vsyncadd [#allocation4], %s561
      %s563 = sshll.u32 [#allocation7], 4
      %s564 = int_to_ptr.vmem [resolvable:$true] %s563
      %569 = dma.vmem_to_hbm [thread:$0]  %s564, 32, %s3, [#allocation4], 32, 32, 2
    $region25: #{tpu_custom_call.1} parent=1 // pred_fallthru
      _
    // Predicated region
    $region26: #{tpu_custom_call.1} parent=1 // pred_check
      _
    $region27: #{tpu_custom_call.1} parent=1 // pred_check_branch
      %571 = sbr.rel (0) target = $region29
    $region28: #{tpu_custom_call.1} parent=1 // pred_region
      %572 = dma.done [#allocation4], 1024
    $region29: #{tpu_custom_call.1} parent=1 // pred_fallthru
      _
    %573 = vsyncpa [#allocation3], 1
    %574 = vsyncpa [#allocation6], 1
    %575 = vsyncpa [#allocation4], 1

</llo_original>
